<compile_context>
chip_gen: v5e
topology: v5e:2x2
jax: 0.10.0
libtpu: 0.0.40
codegen_flags: <defaults>
</compile_context>

<pallas_src>
import jax
import jax.numpy as jnp
from jax.experimental import pallas as pl
from jax.experimental.pallas import tpu as pltpu

# ----------------------------- problem sizes -----------------------------
B, L = 2, 8          # batch, sequence length
VOCAB = 50           # vocab_size
EMB = 32             # emb_size (== config.hidden_size here)
HID = 32             # config.hidden_size
FFN = 64             # feed-forward inner dim

N2 = 2 * B           # stacked "sentences" (contexts then responses)
N = N2 * L           # flattened token rows

_VMEM = pl.BlockSpec(memory_space=pltpu.MemorySpace.VMEM)


# ----------------------------- fused Pallas kernel -----------------------------
def _fused_kernel(ids_ref, mask_ref, emb_ref, pos_ref, wqkv_ref, wo_ref,
                  w1_ref, w2_ref, small_ref, m_ref, out_ref):
    """Encode both sequences ([2B, L]) and produce sigmoid(c @ M @ r^T) probs."""
    ids = ids_ref[...]                                                   # [N, 1] int32
    mask = mask_ref[...]                                                 # [N2, L]

    # --- embedding gather (one-hot matmul) + positional encoding ---
    onehot = (jax.lax.broadcasted_iota(jnp.int32, (N, VOCAB), 1)
              == ids).astype(jnp.float32)                                # [N, VOCAB]
    x = jnp.dot(onehot, emb_ref[...],
                preferred_element_type=jnp.float32) + pos_ref[...]       # [N, H]

    # --- packed small params ---
    sp = small_ref[...]                                                  # [8, 128]
    b1 = sp[0:1, :FFN]
    b2 = sp[1:2, :HID]
    g1 = sp[2:3, :HID]
    be1 = sp[3:4, :HID]
    g2 = sp[4:5, :HID]
    be2 = sp[5:6, :HID]

    # --- fused QKV projection (scale folded into Wq) ---
    qkv = jnp.dot(x, wqkv_ref[...], preferred_element_type=jnp.float32)  # [N, 3H]
    q = qkv[:, :HID].reshape(N2, L, HID)
    k = qkv[:, HID:2 * HID].reshape(N2, L, HID)
    v = qkv[:, 2 * HID:].reshape(N2, L, HID)

    scores = jnp.einsum('bqd,bkd->bqk', q, k,
                        preferred_element_type=jnp.float32)              # [N2, L, L]
    key_mask = mask[:, None, :]                                          # [N2, 1, L]
    scores = jnp.where(key_mask > 0.0, scores, jnp.float32(-1e9))

    smax = jnp.max(scores, axis=-1, keepdims=True)
    p = jnp.exp(scores - smax)
    denom = jnp.sum(p, axis=-1, keepdims=True)
    attn = p * pl.reciprocal(denom, approx=True)                         # softmax
    ctx = jnp.einsum('bqk,bkd->bqd', attn, v,
                     preferred_element_type=jnp.float32)                 # [N2, L, H]
    attn_out = jnp.dot(ctx.reshape(N, HID), wo_ref[...],
                       preferred_element_type=jnp.float32)               # [N, H]

    def layer_norm(h, g, b):
        mu = jnp.mean(h, axis=-1, keepdims=True)
        var = jnp.mean((h - mu) ** 2, axis=-1, keepdims=True)
        return (h - mu) * jax.lax.rsqrt(var + 1e-5) * g + b

    h1 = layer_norm(x + attn_out, g1, be1)                               # [N, H]

    # --- position-wise feed forward ---
    f = jnp.dot(h1, w1_ref[...], preferred_element_type=jnp.float32) + b1
    f = jnp.maximum(f, 0.0)
    f = jnp.dot(f, w2_ref[...], preferred_element_type=jnp.float32) + b2
    h2 = layer_norm(h1 + f, g2, be2)                                     # [N, H]

    # --- masked mean pooling over the sequence -> sentence vectors ---
    h2_3d = h2.reshape(N2, L, HID)
    pooled_sum = jnp.sum(h2_3d * mask[:, :, None], axis=1)               # [N2, H]
    counts = jnp.sum(mask, axis=1, keepdims=True)                        # [N2, 1]
    pooled = pooled_sum * pl.reciprocal(jnp.maximum(counts, 1.0),
                                        approx=True)                     # [N2, H]

    # --- score: sigmoid(c @ M . r) ---
    c = pooled[:B]                                                       # [B, H]
    r = pooled[B:]                                                       # [B, H]
    cm = jnp.dot(c, m_ref[...], preferred_element_type=jnp.float32)      # [B, H]
    score = jnp.sum(cm * r, axis=-1, keepdims=True)                      # [B, 1]
    prob = 1.0 / (1.0 + jnp.exp(-score))                                 # exact sigmoid

    # lane-dense output slab: broadcast probs across 128 lanes
    out_ref[...] = jnp.broadcast_to(prob, (B, 128)).astype(out_ref.dtype)


# ----------------------------- wrapper -----------------------------
def text_transformer_encoder(contexts, cm, responses, rm, p):
    """Equivalent of TextTransformerEncoder.forward -> probs [B, 1]."""
    ids = jnp.concatenate([contexts, responses], axis=0)                 # [2B, L]
    ids = ids.reshape(N, 1).astype(jnp.int32)
    masks = jnp.concatenate([cm, rm], axis=0).astype(jnp.float32)        # [2B, L]

    args = (ids, masks, p['emb'], p['pos_flat'], p['wqkv'], p['wo'],
            p['w1'], p['w2'], p['small'], p['M'])
    out = pl.pallas_call(
        _fused_kernel,
        out_shape=jax.ShapeDtypeStruct((B, 128), jnp.float32),
        in_specs=[_VMEM] * len(args),
        out_specs=_VMEM,
    )(*args)
    return out[:, :1]                                                    # [B, 1]


# ----------------------------- parameter init -----------------------------
def _positional_encoding(length, dim):
    pos = jnp.arange(length, dtype=jnp.float32)[:, None]
    i = jnp.arange(dim, dtype=jnp.float32)[None, :]
    angle = pos / jnp.power(10000.0, (2.0 * jnp.floor(i / 2.0)) / dim)
    return jnp.where(jnp.mod(jnp.arange(dim), 2) == 0,
                     jnp.sin(angle), jnp.cos(angle))


def _init_params(key):
    ks = jax.random.split(key, 8)

    def xavier(k, shape):
        std = (2.0 / (shape[0] + shape[1])) ** 0.5
        return std * jax.random.normal(k, shape, jnp.float32)

    wq = xavier(ks[1], (HID, HID))
    wk = xavier(ks[2], (HID, HID))
    wv = xavier(ks[3], (HID, HID))
    scale = 1.0 / jnp.sqrt(jnp.float32(HID))
    wqkv = jnp.concatenate([wq * scale, wk, wv], axis=1)                 # [H, 3H]

    b1 = jnp.zeros((FFN,), jnp.float32)
    b2 = jnp.zeros((HID,), jnp.float32)
    g1 = jnp.ones((HID,), jnp.float32)
    be1 = jnp.zeros((HID,), jnp.float32)
    g2 = jnp.ones((HID,), jnp.float32)
    be2 = jnp.zeros((HID,), jnp.float32)
    small = jnp.zeros((8, 128), jnp.float32)
    small = small.at[0, :FFN].set(b1)
    small = small.at[1, :HID].set(b2)
    small = small.at[2, :HID].set(g1)
    small = small.at[3, :HID].set(be1)
    small = small.at[4, :HID].set(g2)
    small = small.at[5, :HID].set(be2)

    pos_flat = jnp.tile(_positional_encoding(L, EMB), (N2, 1))           # [2B*L, H]

    return dict(
        emb=0.1 * jax.random.normal(ks[0], (VOCAB, EMB), jnp.float32),
        pos_flat=pos_flat,
        wqkv=wqkv,
        wo=xavier(ks[4], (HID, HID)),
        w1=xavier(ks[5], (HID, FFN)),
        w2=xavier(ks[6], (FFN, HID)),
        small=small,
        M=xavier(ks[7], (HID, HID)),   # init.xavier_normal_(M)
    )


# ----------------------------- main -----------------------------
if __name__ == "__main__":
    root = jax.random.PRNGKey(0)
    k_p, k_c, k_r = jax.random.split(root, 3)
    params = _init_params(k_p)

    contexts = jax.random.randint(k_c, (B, L), 0, VOCAB, dtype=jnp.int32)
    responses = jax.random.randint(k_r, (B, L), 0, VOCAB, dtype=jnp.int32)
    # padding masks: 1 = real token, 0 = pad
    cm = (jnp.arange(L)[None, :] < jnp.array([[8], [5]])).astype(jnp.float32)
    rm = (jnp.arange(L)[None, :] < jnp.array([[6], [8]])).astype(jnp.float32)

    probs = jax.jit(text_transformer_encoder)(contexts, cm, responses, rm, params)
    probs = jax.block_until_ready(probs)

    assert probs.shape == (B, 1)
    assert bool(jnp.all(jnp.isfinite(probs)))
    assert bool(jnp.all((probs >= 0.0) & (probs <= 1.0)))
    print("KERNEL_OK")
</pallas_src>

<mosaic_0001>
module attributes {stable_mosaic.version = 11 : i64} {
  func.func @_fused_kernel(%arg0: memref<32x1xi32, #tpu.memory_space<vmem>>, %arg1: memref<4x8xf32, #tpu.memory_space<vmem>>, %arg2: memref<50x32xf32, #tpu.memory_space<vmem>>, %arg3: memref<32x32xf32, #tpu.memory_space<vmem>>, %arg4: memref<32x96xf32, #tpu.memory_space<vmem>>, %arg5: memref<32x32xf32, #tpu.memory_space<vmem>>, %arg6: memref<32x64xf32, #tpu.memory_space<vmem>>, %arg7: memref<64x32xf32, #tpu.memory_space<vmem>>, %arg8: memref<8x128xf32, #tpu.memory_space<vmem>>, %arg9: memref<32x32xf32, #tpu.memory_space<vmem>>, %arg10: memref<2x128xf32, #tpu.memory_space<vmem>>) attributes {dimension_semantics = [], scalar_prefetch = 0 : i64, scratch_operands = 0 : i64, tpu.core_type = #tpu.core_type<tc>} {
    %c0 = arith.constant 0 : index
    %c0_0 = arith.constant 0 : index
    %0 = vector.load %arg0[%c0, %c0_0] : memref<32x1xi32, #tpu.memory_space<vmem>>, vector<32x1xi32>
    %c0_1 = arith.constant 0 : index
    %c0_2 = arith.constant 0 : index
    %1 = vector.load %arg1[%c0_1, %c0_2] : memref<4x8xf32, #tpu.memory_space<vmem>>, vector<4x8xf32>
    %2 = tpu.iota {dimensions = array<i32: 1>} : vector<32x50xi32>
    %3 = vector.broadcast %0 : vector<32x1xi32> to vector<32x50xi32>
    %4 = arith.cmpi eq, %2, %3 : vector<32x50xi32>
    %5 = arith.extui %4 : vector<32x50xi1> to vector<32x50xi32>
    %6 = arith.sitofp %5 : vector<32x50xi32> to vector<32x50xf32>
    %c0_3 = arith.constant 0 : index
    %c0_4 = arith.constant 0 : index
    %7 = vector.load %arg2[%c0_3, %c0_4] : memref<50x32xf32, #tpu.memory_space<vmem>>, vector<50x32xf32>
    %cst = arith.constant dense<0.000000e+00> : vector<32x32xf32>
    %8 = tpu.matmul %6, %7, %cst {dimension_numbers = #tpu.dot_dimension_numbers<[1], [0], [0], [1], [0, 0, 1, 1], [], []>} : vector<32x50xf32>, vector<50x32xf32>, vector<32x32xf32> -> vector<32x32xf32>
    %c0_5 = arith.constant 0 : index
    %c0_6 = arith.constant 0 : index
    %9 = vector.load %arg3[%c0_5, %c0_6] : memref<32x32xf32, #tpu.memory_space<vmem>>, vector<32x32xf32>
    %10 = arith.addf %8, %9 : vector<32x32xf32>
    %c0_7 = arith.constant 0 : index
    %c0_8 = arith.constant 0 : index
    %11 = vector.load %arg8[%c0_7, %c0_8] : memref<8x128xf32, #tpu.memory_space<vmem>>, vector<8x128xf32>
    %12 = vector.extract_strided_slice %11 {offsets = [0, 0], sizes = [1, 64], strides = [1, 1]} : vector<8x128xf32> to vector<1x64xf32>
    %13 = vector.extract_strided_slice %11 {offsets = [1, 0], sizes = [1, 32], strides = [1, 1]} : vector<8x128xf32> to vector<1x32xf32>
    %14 = vector.extract_strided_slice %11 {offsets = [2, 0], sizes = [1, 32], strides = [1, 1]} : vector<8x128xf32> to vector<1x32xf32>
    %15 = vector.extract_strided_slice %11 {offsets = [3, 0], sizes = [1, 32], strides = [1, 1]} : vector<8x128xf32> to vector<1x32xf32>
    %16 = vector.extract_strided_slice %11 {offsets = [4, 0], sizes = [1, 32], strides = [1, 1]} : vector<8x128xf32> to vector<1x32xf32>
    %17 = vector.extract_strided_slice %11 {offsets = [5, 0], sizes = [1, 32], strides = [1, 1]} : vector<8x128xf32> to vector<1x32xf32>
    %c0_9 = arith.constant 0 : index
    %c0_10 = arith.constant 0 : index
    %18 = vector.load %arg4[%c0_9, %c0_10] : memref<32x96xf32, #tpu.memory_space<vmem>>, vector<32x96xf32>
    %cst_11 = arith.constant dense<0.000000e+00> : vector<32x96xf32>
    %19 = tpu.matmul %10, %18, %cst_11 {dimension_numbers = #tpu.dot_dimension_numbers<[1], [0], [0], [1], [0, 0, 1, 1], [], []>} : vector<32x32xf32>, vector<32x96xf32>, vector<32x96xf32> -> vector<32x96xf32>
    %20 = vector.extract_strided_slice %19 {offsets = [0, 0], sizes = [32, 32], strides = [1, 1]} : vector<32x96xf32> to vector<32x32xf32>
    %21 = vector.shape_cast %20 : vector<32x32xf32> to vector<4x8x32xf32>
    %22 = vector.extract_strided_slice %19 {offsets = [0, 32], sizes = [32, 32], strides = [1, 1]} : vector<32x96xf32> to vector<32x32xf32>
    %23 = vector.shape_cast %22 : vector<32x32xf32> to vector<4x8x32xf32>
    %24 = vector.extract_strided_slice %19 {offsets = [0, 64], sizes = [32, 32], strides = [1, 1]} : vector<32x96xf32> to vector<32x32xf32>
    %25 = vector.shape_cast %24 : vector<32x32xf32> to vector<4x8x32xf32>
    "tpu.trace_start"() <{level = 10 : i32, message = "bqd,bkd->bqk"}> : () -> ()
    %cst_12 = arith.constant dense<0.000000e+00> : vector<4x8x8xf32>
    %26 = tpu.matmul %21, %23, %cst_12 {dimension_numbers = #tpu.dot_dimension_numbers<[2], [2], [1], [1], [0, 0, 0, 1, 1, 1], [0], [0]>} : vector<4x8x32xf32>, vector<4x8x32xf32>, vector<4x8x8xf32> -> vector<4x8x8xf32>
    "tpu.trace_stop"() : () -> ()
    %27 = vector.shape_cast %1 : vector<4x8xf32> to vector<4x1x8xf32>
    %cst_13 = arith.constant 0.000000e+00 : f32
    %28 = vector.broadcast %cst_13 : f32 to vector<4x1x8xf32>
    %29 = arith.cmpf ogt, %27, %28 : vector<4x1x8xf32>
    %cst_14 = arith.constant -1.000000e+09 : f32
    %30 = vector.shape_cast %29 : vector<4x1x8xi1> to vector<4x1x8xi1>
    %31 = vector.broadcast %30 : vector<4x1x8xi1> to vector<4x8x8xi1>
    %32 = vector.broadcast %cst_14 : f32 to vector<4x8x8xf32>
    %33 = arith.select %31, %26, %32 : vector<4x8x8xi1>, vector<4x8x8xf32>
    %cst_15 = arith.constant dense<0xFF800000> : vector<4x8xf32>
    %34 = vector.multi_reduction <maximumf>, %33, %cst_15 [2] : vector<4x8x8xf32> to vector<4x8xf32>
    %35 = vector.shape_cast %34 : vector<4x8xf32> to vector<4x8x1xf32>
    %36 = vector.broadcast %35 : vector<4x8x1xf32> to vector<4x8x8xf32>
    %37 = arith.subf %33, %36 : vector<4x8x8xf32>
    %38 = math.exp %37 : vector<4x8x8xf32>
    %cst_16 = arith.constant dense<0.000000e+00> : vector<4x8xf32>
    %39 = vector.multi_reduction <add>, %38, %cst_16 [2] : vector<4x8x8xf32> to vector<4x8xf32>
    %40 = vector.shape_cast %39 : vector<4x8xf32> to vector<4x8x1xf32>
    %41 = tpu.reciprocal %40 {approx = true} : vector<4x8x1xf32> -> vector<4x8x1xf32>
    %42 = vector.broadcast %41 : vector<4x8x1xf32> to vector<4x8x8xf32>
    %43 = arith.mulf %38, %42 : vector<4x8x8xf32>
    "tpu.trace_start"() <{level = 10 : i32, message = "bqk,bkd->bqd"}> : () -> ()
    %cst_17 = arith.constant dense<0.000000e+00> : vector<4x8x32xf32>
    %44 = tpu.matmul %43, %25, %cst_17 {dimension_numbers = #tpu.dot_dimension_numbers<[2], [1], [1], [2], [0, 0, 0, 1, 1, 2], [0], [0]>} : vector<4x8x8xf32>, vector<4x8x32xf32>, vector<4x8x32xf32> -> vector<4x8x32xf32>
    "tpu.trace_stop"() : () -> ()
    %45 = vector.shape_cast %44 : vector<4x8x32xf32> to vector<32x32xf32>
    %c0_18 = arith.constant 0 : index
    %c0_19 = arith.constant 0 : index
    %46 = vector.load %arg5[%c0_18, %c0_19] : memref<32x32xf32, #tpu.memory_space<vmem>>, vector<32x32xf32>
    %cst_20 = arith.constant dense<0.000000e+00> : vector<32x32xf32>
    %47 = tpu.matmul %45, %46, %cst_20 {dimension_numbers = #tpu.dot_dimension_numbers<[1], [0], [0], [1], [0, 0, 1, 1], [], []>} : vector<32x32xf32>, vector<32x32xf32>, vector<32x32xf32> -> vector<32x32xf32>
    %48 = arith.addf %10, %47 : vector<32x32xf32>
    %cst_21 = arith.constant dense<0.000000e+00> : vector<32xf32>
    %49 = vector.multi_reduction <add>, %48, %cst_21 [1] : vector<32x32xf32> to vector<32xf32>
    %50 = vector.shape_cast %49 : vector<32xf32> to vector<32x1xf32>
    %cst_22 = arith.constant 3.200000e+01 : f32
    %51 = vector.broadcast %cst_22 : f32 to vector<32x1xf32>
    %52 = arith.divf %50, %51 : vector<32x1xf32>
    %53 = vector.broadcast %52 : vector<32x1xf32> to vector<32x32xf32>
    %54 = arith.subf %48, %53 : vector<32x32xf32>
    %55 = arith.mulf %54, %54 : vector<32x32xf32>
    %cst_23 = arith.constant dense<0.000000e+00> : vector<32xf32>
    %56 = vector.multi_reduction <add>, %55, %cst_23 [1] : vector<32x32xf32> to vector<32xf32>
    %57 = vector.shape_cast %56 : vector<32xf32> to vector<32x1xf32>
    %cst_24 = arith.constant 3.200000e+01 : f32
    %58 = vector.broadcast %cst_24 : f32 to vector<32x1xf32>
    %59 = arith.divf %57, %58 : vector<32x1xf32>
    %60 = vector.broadcast %52 : vector<32x1xf32> to vector<32x32xf32>
    %61 = arith.subf %48, %60 : vector<32x32xf32>
    %cst_25 = arith.constant 9.99999974E-6 : f32
    %62 = vector.broadcast %cst_25 : f32 to vector<32x1xf32>
    %63 = arith.addf %59, %62 : vector<32x1xf32>
    %64 = math.rsqrt %63 : vector<32x1xf32>
    %65 = vector.broadcast %64 : vector<32x1xf32> to vector<32x32xf32>
    %66 = arith.mulf %61, %65 : vector<32x32xf32>
    %67 = vector.broadcast %14 : vector<1x32xf32> to vector<32x32xf32>
    %68 = arith.mulf %66, %67 : vector<32x32xf32>
    %69 = vector.broadcast %15 : vector<1x32xf32> to vector<32x32xf32>
    %70 = arith.addf %68, %69 : vector<32x32xf32>
    %c0_26 = arith.constant 0 : index
    %c0_27 = arith.constant 0 : index
    %71 = vector.load %arg6[%c0_26, %c0_27] : memref<32x64xf32, #tpu.memory_space<vmem>>, vector<32x64xf32>
    %cst_28 = arith.constant dense<0.000000e+00> : vector<32x64xf32>
    %72 = tpu.matmul %70, %71, %cst_28 {dimension_numbers = #tpu.dot_dimension_numbers<[1], [0], [0], [1], [0, 0, 1, 1], [], []>} : vector<32x32xf32>, vector<32x64xf32>, vector<32x64xf32> -> vector<32x64xf32>
    %73 = vector.broadcast %12 : vector<1x64xf32> to vector<32x64xf32>
    %74 = arith.addf %72, %73 : vector<32x64xf32>
    %cst_29 = arith.constant 0.000000e+00 : f32
    %75 = vector.broadcast %cst_29 : f32 to vector<32x64xf32>
    %76 = arith.maximumf %74, %75 : vector<32x64xf32>
    %c0_30 = arith.constant 0 : index
    %c0_31 = arith.constant 0 : index
    %77 = vector.load %arg7[%c0_30, %c0_31] : memref<64x32xf32, #tpu.memory_space<vmem>>, vector<64x32xf32>
    %cst_32 = arith.constant dense<0.000000e+00> : vector<32x32xf32>
    %78 = tpu.matmul %76, %77, %cst_32 {dimension_numbers = #tpu.dot_dimension_numbers<[1], [0], [0], [1], [0, 0, 1, 1], [], []>} : vector<32x64xf32>, vector<64x32xf32>, vector<32x32xf32> -> vector<32x32xf32>
    %79 = vector.broadcast %13 : vector<1x32xf32> to vector<32x32xf32>
    %80 = arith.addf %78, %79 : vector<32x32xf32>
    %81 = arith.addf %70, %80 : vector<32x32xf32>
    %cst_33 = arith.constant dense<0.000000e+00> : vector<32xf32>
    %82 = vector.multi_reduction <add>, %81, %cst_33 [1] : vector<32x32xf32> to vector<32xf32>
    %83 = vector.shape_cast %82 : vector<32xf32> to vector<32x1xf32>
    %cst_34 = arith.constant 3.200000e+01 : f32
    %84 = vector.broadcast %cst_34 : f32 to vector<32x1xf32>
    %85 = arith.divf %83, %84 : vector<32x1xf32>
    %86 = vector.broadcast %85 : vector<32x1xf32> to vector<32x32xf32>
    %87 = arith.subf %81, %86 : vector<32x32xf32>
    %88 = arith.mulf %87, %87 : vector<32x32xf32>
    %cst_35 = arith.constant dense<0.000000e+00> : vector<32xf32>
    %89 = vector.multi_reduction <add>, %88, %cst_35 [1] : vector<32x32xf32> to vector<32xf32>
    %90 = vector.shape_cast %89 : vector<32xf32> to vector<32x1xf32>
    %cst_36 = arith.constant 3.200000e+01 : f32
    %91 = vector.broadcast %cst_36 : f32 to vector<32x1xf32>
    %92 = arith.divf %90, %91 : vector<32x1xf32>
    %93 = vector.broadcast %85 : vector<32x1xf32> to vector<32x32xf32>
    %94 = arith.subf %81, %93 : vector<32x32xf32>
    %cst_37 = arith.constant 9.99999974E-6 : f32
    %95 = vector.broadcast %cst_37 : f32 to vector<32x1xf32>
    %96 = arith.addf %92, %95 : vector<32x1xf32>
    %97 = math.rsqrt %96 : vector<32x1xf32>
    %98 = vector.broadcast %97 : vector<32x1xf32> to vector<32x32xf32>
    %99 = arith.mulf %94, %98 : vector<32x32xf32>
    %100 = vector.broadcast %16 : vector<1x32xf32> to vector<32x32xf32>
    %101 = arith.mulf %99, %100 : vector<32x32xf32>
    %102 = vector.broadcast %17 : vector<1x32xf32> to vector<32x32xf32>
    %103 = arith.addf %101, %102 : vector<32x32xf32>
    %104 = vector.shape_cast %103 : vector<32x32xf32> to vector<4x8x32xf32>
    %105 = vector.shape_cast %1 : vector<4x8xf32> to vector<4x8x1xf32>
    %106 = vector.broadcast %105 : vector<4x8x1xf32> to vector<4x8x32xf32>
    %107 = arith.mulf %104, %106 : vector<4x8x32xf32>
    %cst_38 = arith.constant dense<0.000000e+00> : vector<4x32xf32>
    %108 = vector.multi_reduction <add>, %107, %cst_38 [1] : vector<4x8x32xf32> to vector<4x32xf32>
    %cst_39 = arith.constant dense<0.000000e+00> : vector<4xf32>
    %109 = vector.multi_reduction <add>, %1, %cst_39 [1] : vector<4x8xf32> to vector<4xf32>
    %110 = vector.shape_cast %109 : vector<4xf32> to vector<4x1xf32>
    %cst_40 = arith.constant 1.000000e+00 : f32
    %111 = vector.broadcast %cst_40 : f32 to vector<4x1xf32>
    %112 = arith.maximumf %110, %111 : vector<4x1xf32>
    %113 = tpu.reciprocal %112 {approx = true} : vector<4x1xf32> -> vector<4x1xf32>
    %114 = vector.broadcast %113 : vector<4x1xf32> to vector<4x32xf32>
    %115 = arith.mulf %108, %114 : vector<4x32xf32>
    %116 = vector.extract_strided_slice %115 {offsets = [0, 0], sizes = [2, 32], strides = [1, 1]} : vector<4x32xf32> to vector<2x32xf32>
    %117 = vector.extract_strided_slice %115 {offsets = [2, 0], sizes = [2, 32], strides = [1, 1]} : vector<4x32xf32> to vector<2x32xf32>
    %c0_41 = arith.constant 0 : index
    %c0_42 = arith.constant 0 : index
    %118 = vector.load %arg9[%c0_41, %c0_42] : memref<32x32xf32, #tpu.memory_space<vmem>>, vector<32x32xf32>
    %cst_43 = arith.constant dense<0.000000e+00> : vector<2x32xf32>
    %119 = tpu.matmul %116, %118, %cst_43 {dimension_numbers = #tpu.dot_dimension_numbers<[1], [0], [0], [1], [0, 0, 1, 1], [], []>} : vector<2x32xf32>, vector<32x32xf32>, vector<2x32xf32> -> vector<2x32xf32>
    %120 = arith.mulf %119, %117 : vector<2x32xf32>
    %cst_44 = arith.constant dense<0.000000e+00> : vector<2xf32>
    %121 = vector.multi_reduction <add>, %120, %cst_44 [1] : vector<2x32xf32> to vector<2xf32>
    %122 = vector.shape_cast %121 : vector<2xf32> to vector<2x1xf32>
    %cst_45 = arith.constant 0.000000e+00 : f32
    %123 = vector.broadcast %cst_45 : f32 to vector<2x1xf32>
    %124 = arith.subf %123, %122 : vector<2x1xf32>
    %125 = math.exp %124 : vector<2x1xf32>
    %cst_46 = arith.constant 1.000000e+00 : f32
    %126 = vector.broadcast %cst_46 : f32 to vector<2x1xf32>
    %127 = arith.addf %126, %125 : vector<2x1xf32>
    %cst_47 = arith.constant 1.000000e+00 : f32
    %128 = vector.broadcast %cst_47 : f32 to vector<2x1xf32>
    %129 = arith.divf %128, %127 : vector<2x1xf32>
    %130 = vector.shape_cast %129 : vector<2x1xf32> to vector<2x1xf32>
    %131 = vector.broadcast %130 : vector<2x1xf32> to vector<2x128xf32>
    %c0_48 = arith.constant 0 : index
    %c0_49 = arith.constant 0 : index
    %132 = vector.load %arg10[%c0_48, %c0_49] : memref<2x128xf32, #tpu.memory_space<vmem>>, vector<2x128xf32>
    tpu.vector_store %arg10[%c0_48, %c0_49], %131 {strides = array<i32>} : memref<2x128xf32, #tpu.memory_space<vmem>>, vector<2x128xf32>,
    return
  }
}

</mosaic_0001>

<llo_original>
// kernel: text_transformer_encoder.1
$region0: #{text_transformer_encoder.1}
  #allocation0 [shape = 'u32[]', space=smem, size = 0x4, offset = 0x4, fixed_abs, tag = 'smem constant byte address 0x4 - core index']
  #allocation1 [shape = 'u32[72,128]{1,0:T(1,128)}', space=vmem, size = 0x9000, scoped, tag = 'internal scratch']
  %s0 = inlined_call_operand.vmem [shape: s32[32,1], index: 0, kind: input, shape index: {}]
  %s1 = inlined_call_operand.vmem [shape: f32[4,8], index: 1, kind: input, shape index: {}]
  %s2 = inlined_call_operand.vmem [shape: f32[50,32], index: 2, kind: input, shape index: {}]
  %s3 = inlined_call_operand.vmem [shape: f32[32,32], index: 3, kind: input, shape index: {}]
  %s4 = inlined_call_operand.vmem [shape: f32[32,96], index: 4, kind: input, shape index: {}]
  %s5 = inlined_call_operand.vmem [shape: f32[32,32], index: 5, kind: input, shape index: {}]
  %s6 = inlined_call_operand.vmem [shape: f32[32,64], index: 6, kind: input, shape index: {}]
  %s7 = inlined_call_operand.vmem [shape: f32[64,32], index: 7, kind: input, shape index: {}]
  %s8 = inlined_call_operand.vmem [shape: f32[8,128], index: 8, kind: input, shape index: {}]
  %s9 = inlined_call_operand.vmem [shape: f32[32,32], index: 9, kind: input, shape index: {}]
  %s10 = inlined_call_operand.vmem [shape: f32[2,128], index: 10, kind: output, shape index: {}]
  %s11 = sld [smem:[#allocation0]]
  $region50: #{text_transformer_encoder.1} parent=0
    _
  %s13 = ssub.s32 1, %s11
  %s14 = scalar_select 0, %s13, %s11
  // Predicated region
  $region2: #{text_transformer_encoder.1} parent=0 // pred_check
    _
  $region3: #{text_transformer_encoder.1} parent=0 // pred_check_branch
    %16 = sbr.rel (0) target = $region5
  $region4: #{text_transformer_encoder.1} parent=0 // pred_region
    _
  $region5: #{text_transformer_encoder.1} parent=0 // pred_fallthru
    _
  // Predicated region
  $region6: #{text_transformer_encoder.1} parent=0 // pred_check
    _
  $region7: #{text_transformer_encoder.1} parent=0 // pred_check_branch
    %18 = sbr.rel (0) target = $region9
  $region8: #{text_transformer_encoder.1} parent=0 // pred_region
    _
  $region9: #{text_transformer_encoder.1} parent=0 // pred_fallthru
    _
  // Predicated region
  $region10: #{text_transformer_encoder.1} parent=0 // pred_check
    _
  $region11: #{text_transformer_encoder.1} parent=0 // pred_check_branch
    %20 = sbr.rel (0) target = $region13
  $region12: #{text_transformer_encoder.1} parent=0 // pred_region
    _
  $region13: #{text_transformer_encoder.1} parent=0 // pred_fallthru
    _
  // Predicated region
  $region14: #{text_transformer_encoder.1} parent=0 // pred_check
    _
  $region15: #{text_transformer_encoder.1} parent=0 // pred_check_branch
    %22 = sbr.rel (0) target = $region17
  $region16: #{text_transformer_encoder.1} parent=0 // pred_region
    _
  $region17: #{text_transformer_encoder.1} parent=0 // pred_fallthru
    _
  // Predicated region
  $region18: #{text_transformer_encoder.1} parent=0 // pred_check
    _
  $region19: #{text_transformer_encoder.1} parent=0 // pred_check_branch
    %24 = sbr.rel (0) target = $region21
  $region20: #{text_transformer_encoder.1} parent=0 // pred_region
    _
  $region21: #{text_transformer_encoder.1} parent=0 // pred_fallthru
    _
  // Predicated region
  $region22: #{text_transformer_encoder.1} parent=0 // pred_check
    _
  $region23: #{text_transformer_encoder.1} parent=0 // pred_check_branch
    %26 = sbr.rel (0) target = $region25
  $region24: #{text_transformer_encoder.1} parent=0 // pred_region
    _
  $region25: #{text_transformer_encoder.1} parent=0 // pred_fallthru
    _
  // Predicated region
  $region26: #{text_transformer_encoder.1} parent=0 // pred_check
    _
  $region27: #{text_transformer_encoder.1} parent=0 // pred_check_branch
    %28 = sbr.rel (0) target = $region29
  $region28: #{text_transformer_encoder.1} parent=0 // pred_region
    _
  $region29: #{text_transformer_encoder.1} parent=0 // pred_fallthru
    _
  // Predicated region
  $region30: #{text_transformer_encoder.1} parent=0 // pred_check
    _
  $region31: #{text_transformer_encoder.1} parent=0 // pred_check_branch
    %30 = sbr.rel (0) target = $region33
  $region32: #{text_transformer_encoder.1} parent=0 // pred_region
    _
  $region33: #{text_transformer_encoder.1} parent=0 // pred_fallthru
    _
  // Predicated region
  $region34: #{text_transformer_encoder.1} parent=0 // pred_check
    _
  $region35: #{text_transformer_encoder.1} parent=0 // pred_check_branch
    %32 = sbr.rel (0) target = $region37
  $region36: #{text_transformer_encoder.1} parent=0 // pred_region
    _
  $region37: #{text_transformer_encoder.1} parent=0 // pred_fallthru
    _
  // Predicated region
  $region38: #{text_transformer_encoder.1} parent=0 // pred_check
    _
  $region39: #{text_transformer_encoder.1} parent=0 // pred_check_branch
    %34 = sbr.rel (0) target = $region41
  $region40: #{text_transformer_encoder.1} parent=0 // pred_region
    _
  $region41: #{text_transformer_encoder.1} parent=0 // pred_fallthru
    _
  %v35 = vld [vmem:[%s0] sm:$0xff]
  %v36 = vld [vmem:[%s0 + $0x8] sm:$0xff]
  %v37 = vld [vmem:[%s0 + $0x10] sm:$0xff]
  %v38 = vld [vmem:[%s0 + $0x18] sm:$0xff]
  %v39 = vld [vmem:[%s1] sm:$0xf]
  %v40 = vlaneseq
  %v41 = vand.u32 %v40, 127
  %42 = vset.pattern.permute.xlu0 0
  %43 = vperm.xlu0 %42, %v35
  %v44 = vpop.permute.xlu0 %43
  %45 = vset.pattern.permute.xlu0 0
  %46 = vperm.xlu0 %45, %v36
  %v47 = vpop.permute.xlu0 %46
  %48 = vset.pattern.permute.xlu0 0
  %49 = vperm.xlu0 %48, %v37
  %v50 = vpop.permute.xlu0 %49
  %51 = vset.pattern.permute.xlu0 0
  %52 = vperm.xlu0 %51, %v38
  %v53 = vpop.permute.xlu0 %52
  %vm54 = vcmp.eq.s32.totalorder %v41, %v44
  %vm55 = vcmp.eq.s32.totalorder %v41, %v47
  %vm56 = vcmp.eq.s32.totalorder %v41, %v50
  %vm57 = vcmp.eq.s32.totalorder %v41, %v53
  %v58 = vsel %vm54, 1, 0
  %v59 = vsel %vm55, 1, 0
  %v60 = vsel %vm56, 1, 0
  %v61 = vsel %vm57, 1, 0
  %v62 = vcvt.s32.f32 %v58
  %v63 = vcvt.s32.f32 %v59
  %v64 = vcvt.s32.f32 %v60
  %v65 = vcvt.s32.f32 %v61
  %v66 = vld [vmem:[%s2] sm:$0xff]
  %v67 = vld [vmem:[%s2 + $0x8] sm:$0xff]
  %v68 = vld [vmem:[%s2 + $0x10] sm:$0xff]
  %v69 = vld [vmem:[%s2 + $0x18] sm:$0xff]
  %v70 = vld [vmem:[%s2 + $0x20] sm:$0xff]
  %v71 = vld [vmem:[%s2 + $0x28] sm:$0xff]
  %v72 = vld [vmem:[%s2 + $0x30] sm:$0x3]
  %v73 = vld [vmem:[%s3] sm:$0xff]
  %v74 = vld [vmem:[%s3 + $0x8] sm:$0xff]
  %v75 = vld [vmem:[%s3 + $0x10] sm:$0xff]
  %v76 = vld [vmem:[%s3 + $0x18] sm:$0xff]
  %vm77 = vcmask 408576
  %v79 = vsel %vm77, %v62, 0
  %v82 = vsel %vm77, %v63, 0
  %v85 = vsel %vm77, %v64, 0
  %v88 = vsel %vm77, %v65, 0
  %vm90 = vcmask 1041408
  %v92 = vsel %vm90, %v72, 0
  %94 = vmatpush.msra.mxu0 0.0
  %95 = vmatpush.msra.mxu0 0.0
  %96 = vmatpush.msra.mxu0 0.0
  %97 = vmatpush.msra.mxu0 0.0
  %98 = vmatpush.msra.mxu0 0.0
  %99 = vmatpush.msra.mxu0 0.0
  %100 = vmatpush.msra.mxu0 0.0
  %101 = vmatpush.msra.mxu0 0.0
  %102 = vmatpush.msra.mxu0 0.0
  %103 = vmatpush.msra.mxu0 %v92
  %104 = vmatpush.msra.mxu0 %v71
  %105 = vmatpush.msra.mxu0 %v70
  %106 = vmatpush.msra.mxu0 %v69
  %107 = vmatpush.msra.mxu0 %v68
  %108 = vmatpush.msra.mxu0 %v67
  %109 = vmatpush.msra.mxu0 %v66
  %110 = vmatmul.f32.gmra.mxu0 %v79
  %v111 = vpop.f32.mrf.mxu0
  %v112 = vadd.f32 %v73, %v111
  %113 = vmatmul.f32.gmra.mxu0 %v82
  %v114 = vpop.f32.mrf.mxu0
  %v115 = vadd.f32 %v74, %v114
  %116 = vmatmul.f32.gmra.mxu0 %v85
  %v117 = vpop.f32.mrf.mxu0
  %v118 = vadd.f32 %v75, %v117
  %119 = vmatmul.f32.gmra.mxu0 %v88
  %v120 = vpop.f32.mrf.mxu0
  %v121 = vadd.f32 %v76, %v120
  %122 = vdwg.mxu0
  %v123 = vld [vmem:[%s8] sm:$0xff]
  %v124 = vld [vmem:[%s4] sm:$0xff]
  %v125 = vld [vmem:[%s4 + $0x8] sm:$0xff]
  %v126 = vld [vmem:[%s4 + $0x10] sm:$0xff]
  %v127 = vld [vmem:[%s4 + $0x18] sm:$0xff]
  %vm128 = vcmask 261120
  %v130 = vsel %vm128, %v112, 0
  %v133 = vsel %vm128, %v115, 0
  %v136 = vsel %vm128, %v118, 0
  %v139 = vsel %vm128, %v121, 0
  %141 = vmatpush.msra.mxu0 0.0
  %142 = vmatpush.msra.mxu0 0.0
  %143 = vmatpush.msra.mxu0 0.0
  %144 = vmatpush.msra.mxu0 0.0
  %145 = vmatpush.msra.mxu0 0.0
  %146 = vmatpush.msra.mxu0 0.0
  %147 = vmatpush.msra.mxu0 0.0
  %148 = vmatpush.msra.mxu0 0.0
  %149 = vmatpush.msra.mxu0 0.0
  %150 = vmatpush.msra.mxu0 0.0
  %151 = vmatpush.msra.mxu0 0.0
  %152 = vmatpush.msra.mxu0 0.0
  %153 = vmatpush.msra.mxu0 %v127
  %154 = vmatpush.msra.mxu0 %v126
  %155 = vmatpush.msra.mxu0 %v125
  %156 = vmatpush.msra.mxu0 %v124
  %157 = vmatmul.f32.gmra.mxu0 %v130
  %v158 = vpop.f32.mrf.mxu0
  %v159 = vadd.f32 0.0, %v158
  %160 = vmatmul.f32.gmra.mxu0 %v133
  %v161 = vpop.f32.mrf.mxu0
  %v162 = vadd.f32 0.0, %v161
  %163 = vmatmul.f32.gmra.mxu0 %v136
  %v164 = vpop.f32.mrf.mxu0
  %v165 = vadd.f32 0.0, %v164
  %166 = vmatmul.f32.gmra.mxu0 %v139
  %v167 = vpop.f32.mrf.mxu0
  %v168 = vadd.f32 0.0, %v167
  %169 = vdwg.mxu0
  %171 = vrot.lane.b32.xlu0 %v159, 96
  %v172 = vpop.permute.xlu0 %171
  %v173 = vsel %vm128, %v159, 0
  %v175 = vsel %vm128, %v172, 0
  %177 = vmatpush.xpose.msra.mxu0 0.0
  %178 = vmatpush.xpose.msra.mxu0 0.0
  %179 = vmatpush.xpose.msra.mxu0 0.0
  %180 = vmatpush.xpose.msra.mxu0 0.0
  %181 = vmatpush.xpose.msra.mxu0 0.0
  %182 = vmatpush.xpose.msra.mxu0 0.0
  %183 = vmatpush.xpose.msra.mxu0 0.0
  %184 = vmatpush.xpose.msra.mxu0 0.0
  %185 = vmatpush.xpose.msra.mxu0 0.0
  %186 = vmatpush.xpose.msra.mxu0 0.0
  %187 = vmatpush.xpose.msra.mxu0 0.0
  %188 = vmatpush.xpose.msra.mxu0 0.0
  %189 = vmatpush.xpose.msra.mxu0 0.0
  %190 = vmatpush.xpose.msra.mxu0 0.0
  %191 = vmatpush.xpose.msra.mxu0 0.0
  %192 = vmatpush.xpose.msra.mxu0 %v175
  %193 = vmatmul.f32.gmra.mxu0 %v173
  %v194 = vpop.f32.mrf.mxu0
  %v195 = vadd.f32 0.0, %v194
  %196 = vdwg.mxu0
  %198 = vrot.lane.b32.xlu0 %v162, 96
  %v199 = vpop.permute.xlu0 %198
  %v200 = vsel %vm128, %v162, 0
  %v202 = vsel %vm128, %v199, 0
  %204 = vmatpush.xpose.msra.mxu0 0.0
  %205 = vmatpush.xpose.msra.mxu0 0.0
  %206 = vmatpush.xpose.msra.mxu0 0.0
  %207 = vmatpush.xpose.msra.mxu0 0.0
  %208 = vmatpush.xpose.msra.mxu0 0.0
  %209 = vmatpush.xpose.msra.mxu0 0.0
  %210 = vmatpush.xpose.msra.mxu0 0.0
  %211 = vmatpush.xpose.msra.mxu0 0.0
  %212 = vmatpush.xpose.msra.mxu0 0.0
  %213 = vmatpush.xpose.msra.mxu0 0.0
  %214 = vmatpush.xpose.msra.mxu0 0.0
  %215 = vmatpush.xpose.msra.mxu0 0.0
  %216 = vmatpush.xpose.msra.mxu0 0.0
  %217 = vmatpush.xpose.msra.mxu0 0.0
  %218 = vmatpush.xpose.msra.mxu0 0.0
  %219 = vmatpush.xpose.msra.mxu0 %v202
  %220 = vmatmul.f32.gmra.mxu0 %v200
  %v221 = vpop.f32.mrf.mxu0
  %v222 = vadd.f32 0.0, %v221
  %223 = vdwg.mxu0
  %225 = vrot.lane.b32.xlu0 %v165, 96
  %v226 = vpop.permute.xlu0 %225
  %v227 = vsel %vm128, %v165, 0
  %v229 = vsel %vm128, %v226, 0
  %231 = vmatpush.xpose.msra.mxu0 0.0
  %232 = vmatpush.xpose.msra.mxu0 0.0
  %233 = vmatpush.xpose.msra.mxu0 0.0
  %234 = vmatpush.xpose.msra.mxu0 0.0
  %235 = vmatpush.xpose.msra.mxu0 0.0
  %236 = vmatpush.xpose.msra.mxu0 0.0
  %237 = vmatpush.xpose.msra.mxu0 0.0
  %238 = vmatpush.xpose.msra.mxu0 0.0
  %239 = vmatpush.xpose.msra.mxu0 0.0
  %240 = vmatpush.xpose.msra.mxu0 0.0
  %241 = vmatpush.xpose.msra.mxu0 0.0
  %242 = vmatpush.xpose.msra.mxu0 0.0
  %243 = vmatpush.xpose.msra.mxu0 0.0
  %244 = vmatpush.xpose.msra.mxu0 0.0
  %245 = vmatpush.xpose.msra.mxu0 0.0
  %246 = vmatpush.xpose.msra.mxu0 %v229
  %247 = vmatmul.f32.gmra.mxu0 %v227
  %v248 = vpop.f32.mrf.mxu0
  %v249 = vadd.f32 0.0, %v248
  %250 = vdwg.mxu0
  %252 = vrot.lane.b32.xlu0 %v168, 96
  %v253 = vpop.permute.xlu0 %252
  %v254 = vsel %vm128, %v168, 0
  %v256 = vsel %vm128, %v253, 0
  %258 = vmatpush.xpose.msra.mxu0 0.0
  %259 = vmatpush.xpose.msra.mxu0 0.0
  %260 = vmatpush.xpose.msra.mxu0 0.0
  %261 = vmatpush.xpose.msra.mxu0 0.0
  %262 = vmatpush.xpose.msra.mxu0 0.0
  %263 = vmatpush.xpose.msra.mxu0 0.0
  %264 = vmatpush.xpose.msra.mxu0 0.0
  %265 = vmatpush.xpose.msra.mxu0 0.0
  %266 = vmatpush.xpose.msra.mxu0 0.0
  %267 = vmatpush.xpose.msra.mxu0 0.0
  %268 = vmatpush.xpose.msra.mxu0 0.0
  %269 = vmatpush.xpose.msra.mxu0 0.0
  %270 = vmatpush.xpose.msra.mxu0 0.0
  %271 = vmatpush.xpose.msra.mxu0 0.0
  %272 = vmatpush.xpose.msra.mxu0 0.0
  %273 = vmatpush.xpose.msra.mxu0 %v256
  %274 = vmatmul.f32.gmra.mxu0 %v254
  %v275 = vpop.f32.mrf.mxu0
  %v276 = vadd.f32 0.0, %v275
  %277 = vdwg.mxu0
  %v279 = vrot.slane %v39, 1
  %v280 = vrot.slane %v39, 2
  %v281 = vrot.slane %v39, 3
  %vm285 = vcmp.gt.f32.partialorder %v39, 0.0
  %vm286 = vcmp.gt.f32.partialorder %v279, 0.0
  %vm287 = vcmp.gt.f32.partialorder %v280, 0.0
  %vm288 = vcmp.gt.f32.partialorder %v281, 0.0
  %v289 = vsel %vm285, 1, 0
  %v290 = vsel %vm286, 1, 0
  %v291 = vsel %vm287, 1, 0
  %v292 = vsel %vm288, 1, 0
  %v293 = vperm.slane %v289, 0
  %v294 = vperm.slane %v290, 0
  %v295 = vperm.slane %v291, 0
  %v296 = vperm.slane %v292, 0
  %vm297 = vcmp.eq.s32.totalorder %v293, 1
  %vm298 = vcmp.eq.s32.totalorder %v294, 1
  %vm299 = vcmp.eq.s32.totalorder %v295, 1
  %vm300 = vcmp.eq.s32.totalorder %v296, 1
  %v301 = vsel %vm297, %v195, -1e+09
  %v302 = vsel %vm298, %v222, -1e+09
  %v303 = vsel %vm299, %v249, -1e+09
  %v304 = vsel %vm300, %v276, -1e+09
  %vm305 = vcmask 64512
  %v306 = vsel %vm305, %v301, -inf
  %307 = vmax.xlane.f32.xlu0 %v306
  %v308 = vpop.xlane.xlu0 %307
  %v309 = vsel %vm305, %v302, -inf
  %310 = vmax.xlane.f32.xlu0 %v309
  %v311 = vpop.xlane.xlu0 %310
  %v312 = vsel %vm305, %v303, -inf
  %313 = vmax.xlane.f32.xlu0 %v312
  %v314 = vpop.xlane.xlu0 %313
  %v315 = vsel %vm305, %v304, -inf
  %316 = vmax.xlane.f32.xlu0 %v315
  %v317 = vpop.xlane.xlu0 %316
  %v318 = vsub.f32 %v301, %v308
  %v319 = vsub.f32 %v302, %v311
  %v320 = vsub.f32 %v303, %v314
  %v321 = vsub.f32 %v304, %v317
  %v322 = vmul.f32 %v318, 1.442695
  %v323 = vpow.pop %v322
  %v324 = vmul.f32 %v319, 1.442695
  %v325 = vpow.pop %v324
  %v326 = vmul.f32 %v320, 1.442695
  %v327 = vpow.pop %v326
  %v328 = vmul.f32 %v321, 1.442695
  %v329 = vpow.pop %v328
  %v330 = vsel %vm305, %v323, 0.0
  %331 = vadd.xlane.f32.xlu0 %v330
  %v332 = vpop.xlane.xlu0 %331
  %v333 = vsel %vm305, %v325, 0.0
  %334 = vadd.xlane.f32.xlu0 %v333
  %v335 = vpop.xlane.xlu0 %334
  %v336 = vsel %vm305, %v327, 0.0
  %337 = vadd.xlane.f32.xlu0 %v336
  %v338 = vpop.xlane.xlu0 %337
  %v339 = vsel %vm305, %v329, 0.0
  %340 = vadd.xlane.f32.xlu0 %v339
  %v341 = vpop.xlane.xlu0 %340
  %v342 = vrcp.pop %v332
  %v343 = vrcp.pop %v335
  %v344 = vrcp.pop %v338
  %v345 = vrcp.pop %v341
  %v346 = vmul.f32 %v323, %v342
  %v347 = vmul.f32 %v325, %v343
  %v348 = vmul.f32 %v327, %v344
  %v349 = vmul.f32 %v329, %v345
  %350 = vrot.lane.b32.xlu0 %v159, 64
  %v351 = vpop.permute.xlu0 %350
  %v354 = vsel %vm305, %v346, 0
  %356 = vmatpush.msra.mxu0 0.0
  %357 = vmatpush.msra.mxu0 0.0
  %358 = vmatpush.msra.mxu0 0.0
  %359 = vmatpush.msra.mxu0 0.0
  %360 = vmatpush.msra.mxu0 0.0
  %361 = vmatpush.msra.mxu0 0.0
  %362 = vmatpush.msra.mxu0 0.0
  %363 = vmatpush.msra.mxu0 0.0
  %364 = vmatpush.msra.mxu0 0.0
  %365 = vmatpush.msra.mxu0 0.0
  %366 = vmatpush.msra.mxu0 0.0
  %367 = vmatpush.msra.mxu0 0.0
  %368 = vmatpush.msra.mxu0 0.0
  %369 = vmatpush.msra.mxu0 0.0
  %370 = vmatpush.msra.mxu0 0.0
  %371 = vmatpush.msra.mxu0 %v351
  %372 = vmatmul.f32.gmra.mxu0 %v354
  %v373 = vpop.f32.mrf.mxu0
  %v374 = vadd.f32 0.0, %v373
  %375 = vdwg.mxu0
  %376 = vrot.lane.b32.xlu0 %v162, 64
  %v377 = vpop.permute.xlu0 %376
  %v380 = vsel %vm305, %v347, 0
  %382 = vmatpush.msra.mxu0 0.0
  %383 = vmatpush.msra.mxu0 0.0
  %384 = vmatpush.msra.mxu0 0.0
  %385 = vmatpush.msra.mxu0 0.0
  %386 = vmatpush.msra.mxu0 0.0
  %387 = vmatpush.msra.mxu0 0.0
  %388 = vmatpush.msra.mxu0 0.0
  %389 = vmatpush.msra.mxu0 0.0
  %390 = vmatpush.msra.mxu0 0.0
  %391 = vmatpush.msra.mxu0 0.0
  %392 = vmatpush.msra.mxu0 0.0
  %393 = vmatpush.msra.mxu0 0.0
  %394 = vmatpush.msra.mxu0 0.0
  %395 = vmatpush.msra.mxu0 0.0
  %396 = vmatpush.msra.mxu0 0.0
  %397 = vmatpush.msra.mxu0 %v377
  %398 = vmatmul.f32.gmra.mxu0 %v380
  %v399 = vpop.f32.mrf.mxu0
  %v400 = vadd.f32 0.0, %v399
  %401 = vdwg.mxu0
  %402 = vrot.lane.b32.xlu0 %v165, 64
  %v403 = vpop.permute.xlu0 %402
  %v406 = vsel %vm305, %v348, 0
  %408 = vmatpush.msra.mxu0 0.0
  %409 = vmatpush.msra.mxu0 0.0
  %410 = vmatpush.msra.mxu0 0.0
  %411 = vmatpush.msra.mxu0 0.0
  %412 = vmatpush.msra.mxu0 0.0
  %413 = vmatpush.msra.mxu0 0.0
  %414 = vmatpush.msra.mxu0 0.0
  %415 = vmatpush.msra.mxu0 0.0
  %416 = vmatpush.msra.mxu0 0.0
  %417 = vmatpush.msra.mxu0 0.0
  %418 = vmatpush.msra.mxu0 0.0
  %419 = vmatpush.msra.mxu0 0.0
  %420 = vmatpush.msra.mxu0 0.0
  %421 = vmatpush.msra.mxu0 0.0
  %422 = vmatpush.msra.mxu0 0.0
  %423 = vmatpush.msra.mxu0 %v403
  %424 = vmatmul.f32.gmra.mxu0 %v406
  %v425 = vpop.f32.mrf.mxu0
  %v426 = vadd.f32 0.0, %v425
  %427 = vdwg.mxu0
  %428 = vrot.lane.b32.xlu0 %v168, 64
  %v429 = vpop.permute.xlu0 %428
  %v432 = vsel %vm305, %v349, 0
  %434 = vmatpush.msra.mxu0 0.0
  %435 = vmatpush.msra.mxu0 0.0
  %436 = vmatpush.msra.mxu0 0.0
  %437 = vmatpush.msra.mxu0 0.0
  %438 = vmatpush.msra.mxu0 0.0
  %439 = vmatpush.msra.mxu0 0.0
  %440 = vmatpush.msra.mxu0 0.0
  %441 = vmatpush.msra.mxu0 0.0
  %442 = vmatpush.msra.mxu0 0.0
  %443 = vmatpush.msra.mxu0 0.0
  %444 = vmatpush.msra.mxu0 0.0
  %445 = vmatpush.msra.mxu0 0.0
  %446 = vmatpush.msra.mxu0 0.0
  %447 = vmatpush.msra.mxu0 0.0
  %448 = vmatpush.msra.mxu0 0.0
  %449 = vmatpush.msra.mxu0 %v429
  %450 = vmatmul.f32.gmra.mxu0 %v432
  %v451 = vpop.f32.mrf.mxu0
  %v452 = vadd.f32 0.0, %v451
  %453 = vdwg.mxu0
  %v454 = vld [vmem:[%s5] sm:$0xff]
  %v455 = vld [vmem:[%s5 + $0x8] sm:$0xff]
  %v456 = vld [vmem:[%s5 + $0x10] sm:$0xff]
  %v457 = vld [vmem:[%s5 + $0x18] sm:$0xff]
  %v459 = vsel %vm128, %v374, 0
  %v462 = vsel %vm128, %v400, 0
  %v465 = vsel %vm128, %v426, 0
  %v468 = vsel %vm128, %v452, 0
  %470 = vmatpush.msra.mxu0 0.0
  %471 = vmatpush.msra.mxu0 0.0
  %472 = vmatpush.msra.mxu0 0.0
  %473 = vmatpush.msra.mxu0 0.0
  %474 = vmatpush.msra.mxu0 0.0
  %475 = vmatpush.msra.mxu0 0.0
  %476 = vmatpush.msra.mxu0 0.0
  %477 = vmatpush.msra.mxu0 0.0
  %478 = vmatpush.msra.mxu0 0.0
  %479 = vmatpush.msra.mxu0 0.0
  %480 = vmatpush.msra.mxu0 0.0
  %481 = vmatpush.msra.mxu0 0.0
  %482 = vmatpush.msra.mxu0 %v457
  %483 = vmatpush.msra.mxu0 %v456
  %484 = vmatpush.msra.mxu0 %v455
  %485 = vmatpush.msra.mxu0 %v454
  %486 = vmatmul.f32.gmra.mxu0 %v459
  %v487 = vpop.f32.mrf.mxu0
  %v488 = vadd.f32 0.0, %v487
  %489 = vmatmul.f32.gmra.mxu0 %v462
  %v490 = vpop.f32.mrf.mxu0
  %v491 = vadd.f32 0.0, %v490
  %492 = vmatmul.f32.gmra.mxu0 %v465
  %v493 = vpop.f32.mrf.mxu0
  %v494 = vadd.f32 0.0, %v493
  %495 = vmatmul.f32.gmra.mxu0 %v468
  %v496 = vpop.f32.mrf.mxu0
  %v497 = vadd.f32 0.0, %v496
  %498 = vdwg.mxu0
  %v499 = vadd.f32 %v112, %v488
  %v500 = vadd.f32 %v115, %v491
  %v501 = vadd.f32 %v118, %v494
  %v502 = vadd.f32 %v121, %v497
  %v503 = vsel %vm128, %v499, 0.0
  %504 = vadd.xlane.f32.xlu0 %v503
  %v505 = vpop.xlane.xlu0 %504
  %v506 = vsel %vm128, %v500, 0.0
  %507 = vadd.xlane.f32.xlu0 %v506
  %v508 = vpop.xlane.xlu0 %507
  %v509 = vsel %vm128, %v501, 0.0
  %510 = vadd.xlane.f32.xlu0 %v509
  %v511 = vpop.xlane.xlu0 %510
  %v512 = vsel %vm128, %v502, 0.0
  %513 = vadd.xlane.f32.xlu0 %v512
  %v514 = vpop.xlane.xlu0 %513
  %v515 = vrcp.pop 32.0
  %v516 = vmul.f32 32.0, %v515
  %v517 = vsub.f32 1.0, %v516
  %v518 = vmul.f32 %v515, %v517
  %v519 = vadd.f32 %v515, %v518
  %vm520 = vweird.f32 %v515
  %v521 = vsel %vm520, %v515, %v519
  %v522 = vmul.f32 %v505, %v521
  %v523 = vmul.f32 %v508, %v521
  %v524 = vmul.f32 %v511, %v521
  %v525 = vmul.f32 %v514, %v521
  %v526 = vsub.f32 %v499, %v522
  %v527 = vsub.f32 %v500, %v523
  %v528 = vsub.f32 %v501, %v524
  %v529 = vsub.f32 %v502, %v525
  %v530 = vmul.f32 %v526, %v526
  %v531 = vmul.f32 %v527, %v527
  %v532 = vmul.f32 %v528, %v528
  %v533 = vmul.f32 %v529, %v529
  %v534 = vsel %vm128, %v530, 0.0
  %535 = vadd.xlane.f32.xlu0 %v534
  %v536 = vpop.xlane.xlu0 %535
  %v537 = vsel %vm128, %v531, 0.0
  %538 = vadd.xlane.f32.xlu0 %v537
  %v539 = vpop.xlane.xlu0 %538
  %v540 = vsel %vm128, %v532, 0.0
  %541 = vadd.xlane.f32.xlu0 %v540
  %v542 = vpop.xlane.xlu0 %541
  %v543 = vsel %vm128, %v533, 0.0
  %544 = vadd.xlane.f32.xlu0 %v543
  %v545 = vpop.xlane.xlu0 %544
  %v546 = vmul.f32 %v536, %v521
  %v547 = vmul.f32 %v539, %v521
  %v548 = vmul.f32 %v542, %v521
  %v549 = vmul.f32 %v545, %v521
  %v550 = vadd.f32 %v546, 1e-05
  %v551 = vadd.f32 %v547, 1e-05
  %v552 = vadd.f32 %v548, 1e-05
  %v553 = vadd.f32 %v549, 1e-05
  %v554 = vrsqrt.pop %v550
  %v555 = vmul.f32 %v554, %v550
  %v556 = vmul.f32 %v555, %v554
  %v557 = vmul.f32 0.5, %v556
  %v558 = vsub.f32 1.5, %v557
  %v559 = vmul.f32 %v554, %v558
  %vm560 = vweird.f32 %v550
  %vm561 = vweird.f32 %v554
  %vm562 = vmor %vm560, %vm561
  %v563 = vsel %vm562, %v554, %v559
  %v564 = vrsqrt.pop %v551
  %v565 = vmul.f32 %v564, %v551
  %v566 = vmul.f32 %v565, %v564
  %v567 = vmul.f32 0.5, %v566
  %v568 = vsub.f32 1.5, %v567
  %v569 = vmul.f32 %v564, %v568
  %vm570 = vweird.f32 %v551
  %vm571 = vweird.f32 %v564
  %vm572 = vmor %vm570, %vm571
  %v573 = vsel %vm572, %v564, %v569
  %v574 = vrsqrt.pop %v552
  %v575 = vmul.f32 %v574, %v552
  %v576 = vmul.f32 %v575, %v574
  %v577 = vmul.f32 0.5, %v576
  %v578 = vsub.f32 1.5, %v577
  %v579 = vmul.f32 %v574, %v578
  %vm580 = vweird.f32 %v552
  %vm581 = vweird.f32 %v574
  %vm582 = vmor %vm580, %vm581
  %v583 = vsel %vm582, %v574, %v579
  %v584 = vrsqrt.pop %v553
  %v585 = vmul.f32 %v584, %v553
  %v586 = vmul.f32 %v585, %v584
  %v587 = vmul.f32 0.5, %v586
  %v588 = vsub.f32 1.5, %v587
  %v589 = vmul.f32 %v584, %v588
  %vm590 = vweird.f32 %v553
  %vm591 = vweird.f32 %v584
  %vm592 = vmor %vm590, %vm591
  %v593 = vsel %vm592, %v584, %v589
  %v594 = vmul.f32 %v526, %v563
  %v595 = vmul.f32 %v527, %v573
  %v596 = vmul.f32 %v528, %v583
  %v597 = vmul.f32 %v529, %v593
  %v598 = vperm.slane %v123, 2
  %v599 = vmul.f32 %v594, %v598
  %v600 = vmul.f32 %v595, %v598
  %v601 = vmul.f32 %v596, %v598
  %v602 = vmul.f32 %v597, %v598
  %v603 = vperm.slane %v123, 3
  %v604 = vadd.f32 %v599, %v603
  %v605 = vadd.f32 %v600, %v603
  %v606 = vadd.f32 %v601, %v603
  %v607 = vadd.f32 %v602, %v603
  %v608 = vld [vmem:[%s6] sm:$0xff]
  %v609 = vld [vmem:[%s6 + $0x8] sm:$0xff]
  %v610 = vld [vmem:[%s6 + $0x10] sm:$0xff]
  %v611 = vld [vmem:[%s6 + $0x18] sm:$0xff]
  %v612 = vperm.slane %v123, 0
  %v614 = vsel %vm128, %v604, 0
  %v617 = vsel %vm128, %v605, 0
  %v620 = vsel %vm128, %v606, 0
  %v623 = vsel %vm128, %v607, 0
  %625 = vmatpush.msra.mxu0 0.0
  %626 = vmatpush.msra.mxu0 0.0
  %627 = vmatpush.msra.mxu0 0.0
  %628 = vmatpush.msra.mxu0 0.0
  %629 = vmatpush.msra.mxu0 0.0
  %630 = vmatpush.msra.mxu0 0.0
  %631 = vmatpush.msra.mxu0 0.0
  %632 = vmatpush.msra.mxu0 0.0
  %633 = vmatpush.msra.mxu0 0.0
  %634 = vmatpush.msra.mxu0 0.0
  %635 = vmatpush.msra.mxu0 0.0
  %636 = vmatpush.msra.mxu0 0.0
  %637 = vmatpush.msra.mxu0 %v611
  %638 = vmatpush.msra.mxu0 %v610
  %639 = vmatpush.msra.mxu0 %v609
  %640 = vmatpush.msra.mxu0 %v608
  %641 = vmatmul.f32.gmra.mxu0 %v614
  %v642 = vpop.f32.mrf.mxu0
  %v643 = vadd.f32 %v612, %v642
  %644 = vmatmul.f32.gmra.mxu0 %v617
  %v645 = vpop.f32.mrf.mxu0
  %v646 = vadd.f32 %v612, %v645
  %647 = vmatmul.f32.gmra.mxu0 %v620
  %v648 = vpop.f32.mrf.mxu0
  %v649 = vadd.f32 %v612, %v648
  %650 = vmatmul.f32.gmra.mxu0 %v623
  %v651 = vpop.f32.mrf.mxu0
  %v652 = vadd.f32 %v612, %v651
  %653 = vdwg.mxu0
  %v654 = vmax.f32 %v643, 0.0
  %v655 = vmax.f32 %v646, 0.0
  %v656 = vmax.f32 %v649, 0.0
  %v657 = vmax.f32 %v652, 0.0
  %v658 = vld [vmem:[%s7] sm:$0xff]
  %v659 = vld [vmem:[%s7 + $0x8] sm:$0xff]
  %v660 = vld [vmem:[%s7 + $0x10] sm:$0xff]
  %v661 = vld [vmem:[%s7 + $0x18] sm:$0xff]
  %v662 = vld [vmem:[%s7 + $0x20] sm:$0xff]
  %v663 = vld [vmem:[%s7 + $0x28] sm:$0xff]
  %v664 = vld [vmem:[%s7 + $0x30] sm:$0xff]
  %v665 = vld [vmem:[%s7 + $0x38] sm:$0xff]
  %v666 = vperm.slane %v123, 1
  %vm667 = vcmask 523264
  %v669 = vsel %vm667, %v654, 0
  %v672 = vsel %vm667, %v655, 0
  %v675 = vsel %vm667, %v656, 0
  %v678 = vsel %vm667, %v657, 0
  %680 = vmatpush.msra.mxu0 0.0
  %681 = vmatpush.msra.mxu0 0.0
  %682 = vmatpush.msra.mxu0 0.0
  %683 = vmatpush.msra.mxu0 0.0
  %684 = vmatpush.msra.mxu0 0.0
  %685 = vmatpush.msra.mxu0 0.0
  %686 = vmatpush.msra.mxu0 0.0
  %687 = vmatpush.msra.mxu0 0.0
  %688 = vmatpush.msra.mxu0 %v665
  %689 = vmatpush.msra.mxu0 %v664
  %690 = vmatpush.msra.mxu0 %v663
  %691 = vmatpush.msra.mxu0 %v662
  %692 = vmatpush.msra.mxu0 %v661
  %693 = vmatpush.msra.mxu0 %v660
  %694 = vmatpush.msra.mxu0 %v659
  %695 = vmatpush.msra.mxu0 %v658
  %696 = vmatmul.f32.gmra.mxu0 %v669
  %v697 = vpop.f32.mrf.mxu0
  %v698 = vadd.f32 %v666, %v697
  %699 = vmatmul.f32.gmra.mxu0 %v672
  %v700 = vpop.f32.mrf.mxu0
  %v701 = vadd.f32 %v666, %v700
  %702 = vmatmul.f32.gmra.mxu0 %v675
  %v703 = vpop.f32.mrf.mxu0
  %v704 = vadd.f32 %v666, %v703
  %705 = vmatmul.f32.gmra.mxu0 %v678
  %v706 = vpop.f32.mrf.mxu0
  %v707 = vadd.f32 %v666, %v706
  %708 = vdwg.mxu0
  %v709 = vadd.f32 %v604, %v698
  %v710 = vadd.f32 %v605, %v701
  %v711 = vadd.f32 %v606, %v704
  %v712 = vadd.f32 %v607, %v707
  %v713 = vsel %vm128, %v709, 0.0
  %714 = vadd.xlane.f32.xlu0 %v713
  %v715 = vpop.xlane.xlu0 %714
  %v716 = vsel %vm128, %v710, 0.0
  %717 = vadd.xlane.f32.xlu0 %v716
  %v718 = vpop.xlane.xlu0 %717
  %v719 = vsel %vm128, %v711, 0.0
  %720 = vadd.xlane.f32.xlu0 %v719
  %v721 = vpop.xlane.xlu0 %720
  %v722 = vsel %vm128, %v712, 0.0
  %723 = vadd.xlane.f32.xlu0 %v722
  %v724 = vpop.xlane.xlu0 %723
  %v725 = vmul.f32 %v715, %v521
  %v726 = vmul.f32 %v718, %v521
  %v727 = vmul.f32 %v721, %v521
  %v728 = vmul.f32 %v724, %v521
  %v729 = vsub.f32 %v709, %v725
  %v730 = vsub.f32 %v710, %v726
  %v731 = vsub.f32 %v711, %v727
  %v732 = vsub.f32 %v712, %v728
  %v733 = vmul.f32 %v729, %v729
  %v734 = vmul.f32 %v730, %v730
  %v735 = vmul.f32 %v731, %v731
  %v736 = vmul.f32 %v732, %v732
  %v737 = vsel %vm128, %v733, 0.0
  %738 = vadd.xlane.f32.xlu0 %v737
  %v739 = vpop.xlane.xlu0 %738
  %v740 = vsel %vm128, %v734, 0.0
  %741 = vadd.xlane.f32.xlu0 %v740
  %v742 = vpop.xlane.xlu0 %741
  %v743 = vsel %vm128, %v735, 0.0
  %744 = vadd.xlane.f32.xlu0 %v743
  %v745 = vpop.xlane.xlu0 %744
  %v746 = vsel %vm128, %v736, 0.0
  %747 = vadd.xlane.f32.xlu0 %v746
  %v748 = vpop.xlane.xlu0 %747
  %v749 = vmul.f32 %v739, %v521
  %v750 = vmul.f32 %v742, %v521
  %v751 = vmul.f32 %v745, %v521
  %v752 = vmul.f32 %v748, %v521
  %v753 = vadd.f32 %v749, 1e-05
  %v754 = vadd.f32 %v750, 1e-05
  %v755 = vadd.f32 %v751, 1e-05
  %v756 = vadd.f32 %v752, 1e-05
  %v757 = vrsqrt.pop %v753
  %v758 = vmul.f32 %v757, %v753
  %v759 = vmul.f32 %v758, %v757
  %v760 = vmul.f32 0.5, %v759
  %v761 = vsub.f32 1.5, %v760
  %v762 = vmul.f32 %v757, %v761
  %vm763 = vweird.f32 %v753
  %vm764 = vweird.f32 %v757
  %vm765 = vmor %vm763, %vm764
  %v766 = vsel %vm765, %v757, %v762
  %v767 = vrsqrt.pop %v754
  %v768 = vmul.f32 %v767, %v754
  %v769 = vmul.f32 %v768, %v767
  %v770 = vmul.f32 0.5, %v769
  %v771 = vsub.f32 1.5, %v770
  %v772 = vmul.f32 %v767, %v771
  %vm773 = vweird.f32 %v754
  %vm774 = vweird.f32 %v767
  %vm775 = vmor %vm773, %vm774
  %v776 = vsel %vm775, %v767, %v772
  %v777 = vrsqrt.pop %v755
  %v778 = vmul.f32 %v777, %v755
  %v779 = vmul.f32 %v778, %v777
  %v780 = vmul.f32 0.5, %v779
  %v781 = vsub.f32 1.5, %v780
  %v782 = vmul.f32 %v777, %v781
  %vm783 = vweird.f32 %v755
  %vm784 = vweird.f32 %v777
  %vm785 = vmor %vm783, %vm784
  %v786 = vsel %vm785, %v777, %v782
  %v787 = vrsqrt.pop %v756
  %v788 = vmul.f32 %v787, %v756
  %v789 = vmul.f32 %v788, %v787
  %v790 = vmul.f32 0.5, %v789
  %v791 = vsub.f32 1.5, %v790
  %v792 = vmul.f32 %v787, %v791
  %vm793 = vweird.f32 %v756
  %vm794 = vweird.f32 %v787
  %vm795 = vmor %vm793, %vm794
  %v796 = vsel %vm795, %v787, %v792
  %v797 = vmul.f32 %v729, %v766
  %v798 = vmul.f32 %v730, %v776
  %v799 = vmul.f32 %v731, %v786
  %v800 = vmul.f32 %v732, %v796
  %v801 = vperm.slane %v123, 4
  %v802 = vmul.f32 %v797, %v801
  %v803 = vmul.f32 %v798, %v801
  %v804 = vmul.f32 %v799, %v801
  %v805 = vmul.f32 %v800, %v801
  %v806 = vperm.slane %v123, 5
  %v807 = vadd.f32 %v802, %v806
  %v808 = vadd.f32 %v803, %v806
  %v809 = vadd.f32 %v804, %v806
  %v810 = vadd.f32 %v805, %v806
  %v811 = vperm.slane %v39, 0
  %v812 = vlaneseq
  %v813 = vshrl.u32 %v812, 7
  %815 = vset.pattern.permute.xlu0 %v813
  %816 = vperm.xlu0 %815, %v811
  %v817 = vpop.permute.xlu0 %816
  %v818 = vperm.slane %v39, 1
  %v819 = vlaneseq
  %v820 = vshrl.u32 %v819, 7
  %822 = vset.pattern.permute.xlu0 %v820
  %823 = vperm.xlu0 %822, %v818
  %v824 = vpop.permute.xlu0 %823
  %v825 = vperm.slane %v39, 2
  %v826 = vlaneseq
  %v827 = vshrl.u32 %v826, 7
  %829 = vset.pattern.permute.xlu0 %v827
  %830 = vperm.xlu0 %829, %v825
  %v831 = vpop.permute.xlu0 %830
  %v832 = vperm.slane %v39, 3
  %v833 = vlaneseq
  %v834 = vshrl.u32 %v833, 7
  %836 = vset.pattern.permute.xlu0 %v834
  %837 = vperm.xlu0 %836, %v832
  %v838 = vpop.permute.xlu0 %837
  %v839 = vmul.f32 %v807, %v817
  %v840 = vmul.f32 %v808, %v824
  %v841 = vmul.f32 %v809, %v831
  %v842 = vmul.f32 %v810, %v838
  %v843 = vsel %vm128, %v839, 0.0
  %v844 = vrot.slane %v843, 4
  %v845 = vadd.f32 %v843, %v844
  %v846 = vrot.slane %v845, 2
  %v847 = vadd.f32 %v845, %v846
  %v848 = vrot.slane %v847, 1
  %v849 = vadd.f32 %v847, %v848
  %v850 = vsel %vm128, %v840, 0.0
  %v851 = vrot.slane %v850, 4
  %v852 = vadd.f32 %v850, %v851
  %v853 = vrot.slane %v852, 2
  %v854 = vadd.f32 %v852, %v853
  %v855 = vrot.slane %v854, 1
  %v856 = vadd.f32 %v854, %v855
  %v857 = vsel %vm128, %v841, 0.0
  %v858 = vrot.slane %v857, 4
  %v859 = vadd.f32 %v857, %v858
  %v860 = vrot.slane %v859, 2
  %v861 = vadd.f32 %v859, %v860
  %v862 = vrot.slane %v861, 1
  %v863 = vadd.f32 %v861, %v862
  %v864 = vsel %vm128, %v842, 0.0
  %v865 = vrot.slane %v864, 4
  %v866 = vadd.f32 %v864, %v865
  %v867 = vrot.slane %v866, 2
  %v868 = vadd.f32 %v866, %v867
  %v869 = vrot.slane %v868, 1
  %v870 = vadd.f32 %v868, %v869
  %vm871 = vcmask 60416
  %v872 = vsel %vm871, %v39, 0.0
  %873 = vadd.xlane.f32.xlu0 %v872
  %v874 = vpop.xlane.xlu0 %873
  %v875 = vmax.f32 %v874, 1.0
  %v876 = vrcp.pop %v875
  %v878 = vrot.slane %v876, 1
  %v879 = vrot.slane %v876, 2
  %v880 = vrot.slane %v876, 3
  %v885 = vmul.f32 %v849, %v876
  %v886 = vmul.f32 %v856, %v878
  %v887 = vmul.f32 %v863, %v879
  %v888 = vmul.f32 %v870, %v880
  %v889 = vld [vmem:[%s9] sm:$0xff]
  %v890 = vld [vmem:[%s9 + $0x8] sm:$0xff]
  %v891 = vld [vmem:[%s9 + $0x10] sm:$0xff]
  %v892 = vld [vmem:[%s9 + $0x18] sm:$0xff]
  %v895 = vrot.slane %v886, 7
  %vm896 = vcmask 1041409
  %v897 = vsel %vm896, %v895, %v885
  %v898 = vsel %vm128, %v897, 0
  %900 = vmatpush.msra.mxu0 0.0
  %901 = vmatpush.msra.mxu0 0.0
  %902 = vmatpush.msra.mxu0 0.0
  %903 = vmatpush.msra.mxu0 0.0
  %904 = vmatpush.msra.mxu0 0.0
  %905 = vmatpush.msra.mxu0 0.0
  %906 = vmatpush.msra.mxu0 0.0
  %907 = vmatpush.msra.mxu0 0.0
  %908 = vmatpush.msra.mxu0 0.0
  %909 = vmatpush.msra.mxu0 0.0
  %910 = vmatpush.msra.mxu0 0.0
  %911 = vmatpush.msra.mxu0 0.0
  %912 = vmatpush.msra.mxu0 %v892
  %913 = vmatpush.msra.mxu0 %v891
  %914 = vmatpush.msra.mxu0 %v890
  %915 = vmatpush.msra.mxu0 %v889
  %916 = vmatmul.f32.gmra.mxu0 %v898
  %v917 = vpop.f32.mrf.mxu0
  %v918 = vadd.f32 0.0, %v917
  %919 = vdwg.mxu0
  %v922 = vrot.slane %v888, 7
  %v923 = vsel %vm896, %v922, %v887
  %v925 = vmul.f32 %v918, %v923
  %vm926 = vcmask 254976
  %v927 = vsel %vm926, %v925, 0.0
  %928 = vadd.xlane.f32.xlu0 %v927
  %v929 = vpop.xlane.xlu0 %928
  %v930 = vsub.f32 0.0, %v929
  %v931 = vmul.f32 %v930, 1.442695
  %v932 = vpow.pop %v931
  %v933 = vadd.f32 %v932, 1.0
  %v934 = vrcp.pop %v933
  %v935 = vmul.f32 %v933, %v934
  %v936 = vsub.f32 1.0, %v935
  %v937 = vmul.f32 %v934, %v936
  %v938 = vadd.f32 %v934, %v937
  %vm939 = vweird.f32 %v933
  %vm940 = vweird.f32 %v934
  %vm941 = vmor %vm939, %vm940
  %v942 = vsel %vm941, %v934, %v938
  %v943 = vand.u32 2147483647, %v933
  %vm944 = vcmp.eq.f32.partialorder %v943, 8.507059e+37
  %v945 = vand.u32 %v933, 2147483648
  %v946 = vor.u32 1.1754944e-38, %v945
  %v947 = vsel %vm944, %v946, %v942
  %v948 = vmul.f32 1.0, %v947
  %949 = vst [vmem:[%s10] sm:$0x3] %v948
  // Predicated region
  $region42: #{text_transformer_encoder.1} parent=0 // pred_check
    _
  $region43: #{text_transformer_encoder.1} parent=0 // pred_check_branch
    %951 = sbr.rel (0) target = $region45
  $region44: #{text_transformer_encoder.1} parent=0 // pred_region
    _
  $region45: #{text_transformer_encoder.1} parent=0 // pred_fallthru
    _
  // Predicated region
  $region46: #{text_transformer_encoder.1} parent=0 // pred_check
    _
  $region47: #{text_transformer_encoder.1} parent=0 // pred_check_branch
    %953 = sbr.rel (0) target = $region49
  $region48: #{text_transformer_encoder.1} parent=0 // pred_region
    _
  $region49: #{text_transformer_encoder.1} parent=0 // pred_fallthru
    _

</llo_original>
